<compile_context>
chip_gen: v7x
topology: tpu7x:2x2x1
jax: 0.10.0
libtpu: 0.0.40
codegen_flags: <defaults>
</compile_context>

<pallas_src>
import functools
import math

import jax
import jax.numpy as jnp
from jax.experimental import pallas as pl
from jax.experimental.pallas import tpu as pltpu


def _pick_tile(dim, candidates):
    """Largest candidate tile that divides `dim`, else the full dim."""
    for c in candidates:
        if dim % c == 0:
            return c
    return dim


# ---------------------------------------------------------------------------
# Kernel 1: tiled linear layer  y = x @ W + b
#   grid = (M//tm, N//tn, K//tk); f32 accumulator in VMEM scratch; bf16 MXU.
# ---------------------------------------------------------------------------
def _linear_kernel(x_ref, w_ref, b_ref, o_ref, acc_ref):
    kk = pl.program_id(2)

    @pl.when(kk == 0)
    def _():
        acc_ref[...] = jnp.zeros_like(acc_ref)

    acc_ref[...] += jnp.dot(
        x_ref[...].astype(jnp.bfloat16),
        w_ref[...].astype(jnp.bfloat16),
        preferred_element_type=jnp.float32,
    )

    @pl.when(kk == pl.num_programs(2) - 1)
    def _():
        o_ref[...] = (acc_ref[...] + b_ref[...]).astype(o_ref.dtype)


def linear(x, w, b, out_dtype=jnp.float32):
    M, K = x.shape
    _, N = w.shape
    tm = _pick_tile(M, (512, 256, 128))
    tn = _pick_tile(N, (512, 256, 128))
    tk = _pick_tile(K, (512, 256, 128))

    return pl.pallas_call(
        _linear_kernel,
        out_shape=jax.ShapeDtypeStruct((M, N), out_dtype),
        grid_spec=pltpu.PrefetchScalarGridSpec(
            num_scalar_prefetch=0,
            grid=(M // tm, N // tn, K // tk),
            in_specs=[
                pl.BlockSpec((tm, tk), lambda i, j, kk: (i, kk)),
                pl.BlockSpec((tk, tn), lambda i, j, kk: (kk, j)),
                pl.BlockSpec((1, tn), lambda i, j, kk: (0, j)),
            ],
            out_specs=pl.BlockSpec((tm, tn), lambda i, j, kk: (i, j)),
            scratch_shapes=[pltpu.VMEM((tm, tn), jnp.float32)],
        ),
        compiler_params=pltpu.CompilerParams(
            dimension_semantics=("parallel", "parallel", "arbitrary")),
    )(x, w, b.reshape(1, N))


# ---------------------------------------------------------------------------
# Kernel 2: flash-style attention (online softmax over KV tiles).
#   grid = (B, NH, T//tq, T//tkv); m/l/acc kept in VMEM scratch across the
#   innermost ("arbitrary") KV axis; mask enters as an additive bias tile.
# ---------------------------------------------------------------------------
def _flash_attn_kernel(q_ref, k_ref, v_ref, bias_ref, o_ref,
                       m_sc, l_sc, acc_sc, *, scale):
    ki = pl.program_id(3)

    @pl.when(ki == 0)
    def _():
        m_sc[...] = jnp.full_like(m_sc, -jnp.inf)
        l_sc[...] = jnp.zeros_like(l_sc)
        acc_sc[...] = jnp.zeros_like(acc_sc)

    q = q_ref[0, 0]          # (tq, DPH)  bf16
    k = k_ref[0, 0]          # (tkv, DPH) bf16
    v = v_ref[0, 0]          # (tkv, DPH) bf16
    bias = bias_ref[0]       # (tq, tkv)  f32 additive mask bias

    # scores: contract the feature dims directly (no k.T materialization).
    s = jax.lax.dot_general(q, k, (((1,), (1,)), ((), ())),
                            preferred_element_type=jnp.float32)
    s = s * scale + bias                                   # (tq, tkv)

    m_prev = m_sc[...]                                     # (tq, 1)
    m_new = jnp.maximum(m_prev, jnp.max(s, axis=-1, keepdims=True))
    alpha = jnp.exp(m_prev - m_new)                        # rescale factor
    p = jnp.exp(s - m_new)                                 # (tq, tkv)

    l_sc[...] = alpha * l_sc[...] + jnp.sum(p, axis=-1, keepdims=True)
    acc_sc[...] = alpha * acc_sc[...] + jnp.dot(
        p.astype(jnp.bfloat16), v, preferred_element_type=jnp.float32)
    m_sc[...] = m_new

    @pl.when(ki == pl.num_programs(3) - 1)
    def _():
        inv_l = pl.reciprocal(l_sc[...], approx=True)      # EUP slot
        o_ref[0, 0] = (acc_sc[...] * inv_l).astype(o_ref.dtype)


def multihead_attention(q, k, v, bias):
    # q, k, v: (B, NH, T, DPH) bf16;  bias: (B, T, T) f32 additive mask bias
    B, NH, T, DPH = q.shape
    scale = 1.0 / math.sqrt(DPH)
    tq = _pick_tile(T, (256, 128))
    tkv = _pick_tile(T, (512, 256, 128))

    kernel = functools.partial(_flash_attn_kernel, scale=scale)
    qkv_spec_q = pl.BlockSpec((1, 1, tq, DPH), lambda b, h, qi, ki: (b, h, qi, 0))
    qkv_spec_kv = pl.BlockSpec((1, 1, tkv, DPH), lambda b, h, qi, ki: (b, h, ki, 0))

    return pl.pallas_call(
        kernel,
        out_shape=jax.ShapeDtypeStruct((B, NH, T, DPH), jnp.bfloat16),
        grid_spec=pltpu.PrefetchScalarGridSpec(
            num_scalar_prefetch=0,
            grid=(B, NH, T // tq, T // tkv),
            in_specs=[
                qkv_spec_q,
                qkv_spec_kv,
                qkv_spec_kv,
                pl.BlockSpec((1, tq, tkv), lambda b, h, qi, ki: (b, qi, ki)),
            ],
            out_specs=pl.BlockSpec((1, 1, tq, DPH),
                                   lambda b, h, qi, ki: (b, h, qi, 0)),
            scratch_shapes=[
                pltpu.VMEM((tq, 1), jnp.float32),    # running max m
                pltpu.VMEM((tq, 1), jnp.float32),    # running denom l
                pltpu.VMEM((tq, DPH), jnp.float32),  # running weighted sum
            ],
        ),
        compiler_params=pltpu.CompilerParams(
            dimension_semantics=("parallel", "parallel", "parallel", "arbitrary")),
    )(q, k, v, bias)


# ---------------------------------------------------------------------------
# SelfAttention module (parameters held as plain arrays)
# ---------------------------------------------------------------------------
class SelfAttention:
    def __init__(self, input_size, hidden_size, num_head, mask_value=0, key=None):
        assert hidden_size % num_head == 0
        self.input_size = input_size
        self.hidden_size = hidden_size
        self.num_head = num_head
        self.dim_per_head = hidden_size // num_head
        self.mask_value = mask_value

        if key is None:
            key = jax.random.PRNGKey(0)
        k1, k2, k3, k4 = jax.random.split(key, 4)
        # qkv: Linear(input_size -> 3*hidden), stored as (in, out): y = x @ W + b.
        bound_qkv = 1.0 / math.sqrt(input_size)
        self.w_qkv = jax.random.uniform(
            k1, (input_size, 3 * hidden_size), jnp.float32, -bound_qkv, bound_qkv)
        self.b_qkv = jax.random.uniform(
            k2, (3 * hidden_size,), jnp.float32, -bound_qkv, bound_qkv)
        # out_proj: Linear(hidden -> input_size)
        bound_out = 1.0 / math.sqrt(hidden_size)
        self.w_out = jax.random.uniform(
            k3, (hidden_size, input_size), jnp.float32, -bound_out, bound_out)
        self.b_out = jax.random.uniform(
            k4, (input_size,), jnp.float32, -bound_out, bound_out)

    def __call__(self, x, mask=None):
        B, T, _ = x.shape
        NH, DPH, H = self.num_head, self.dim_per_head, self.hidden_size

        if mask is None:
            mask = jnp.ones((B, T, T), jnp.float32)
        # Precompute the additive mask bias once (shared across all heads).
        bias = jnp.where(mask.astype(jnp.float32) == float(self.mask_value),
                         jnp.float32(-1e30), jnp.float32(0.0))

        # qkv projection (tiled Pallas matmul), written directly as bf16 since
        # the MXU consumes bf16 q/k/v anyway -> half the HBM traffic.
        qkv = linear(x.reshape(B * T, self.input_size), self.w_qkv, self.b_qkv,
                     out_dtype=jnp.bfloat16)
        # (B, T, 3, NH, DPH): index 0/1/2 on axis 2 == the q/k/v column slabs.
        qkv = qkv.reshape(B, T, 3, NH, DPH)

        # split heads: (B, T, NH, DPH) -> (B, NH, T, DPH)
        # TODO(synk): head split/merge transposes stay host-side (XLA); pulling
        # them into the attention BlockSpec needs DPH/NH aligned to (8,128) tiles.
        q = qkv[:, :, 0].transpose(0, 2, 1, 3)
        k = qkv[:, :, 1].transpose(0, 2, 1, 3)
        v = qkv[:, :, 2].transpose(0, 2, 1, 3)

        # flash-style attention (Pallas kernel), bf16 output (re-consumed by
        # the bf16 MXU in the output projection).
        ctx = multihead_attention(q, k, v, bias)

        # merge heads: (B, NH, T, DPH) -> (B, T, H)
        ctx = ctx.transpose(0, 2, 1, 3).reshape(B, T, H)

        # output projection (tiled Pallas matmul), f32 result like nn.Linear.
        out = linear(ctx.reshape(B * T, H), self.w_out, self.b_out,
                     out_dtype=jnp.float32)
        return out.reshape(B, T, self.input_size)


def _reference(attn, x, mask=None):
    """Pure-JAX f32 reference for correctness checking."""
    B, T, _ = x.shape
    NH, DPH, H = attn.num_head, attn.dim_per_head, attn.hidden_size
    if mask is None:
        mask = jnp.ones((B, T, T), jnp.float32)
    qkv = x.reshape(B * T, -1) @ attn.w_qkv + attn.b_qkv
    qkv = qkv.reshape(B, T, 3, NH, DPH)
    q = qkv[:, :, 0].transpose(0, 2, 1, 3)
    k = qkv[:, :, 1].transpose(0, 2, 1, 3)
    v = qkv[:, :, 2].transpose(0, 2, 1, 3)
    s = jnp.einsum("bhqd,bhkd->bhqk", q, k) / math.sqrt(DPH)
    bias = jnp.where(mask == float(attn.mask_value), -1e30, 0.0)
    s = s + bias[:, None]
    p = jax.nn.softmax(s, axis=-1)
    ctx = jnp.einsum("bhqk,bhkd->bhqd", p, v)
    ctx = ctx.transpose(0, 2, 1, 3).reshape(B, T, H)
    out = ctx.reshape(B * T, H) @ attn.w_out + attn.b_out
    return out.reshape(B, T, -1)


if __name__ == "__main__":
    key = jax.random.PRNGKey(0)
    kx, kp = jax.random.split(key)

    B, T, INPUT, HIDDEN, NHEAD = 2, 8, 32, 32, 4
    x = jax.random.normal(kx, (B, T, INPUT), jnp.float32)

    attn = SelfAttention(INPUT, HIDDEN, NHEAD, mask_value=0, key=kp)
    out = attn(x)                        # mask=None -> all-ones mask (no masking)
    out = jax.block_until_ready(out)

    assert out.shape == (B, T, INPUT)
    assert bool(jnp.all(jnp.isfinite(out)))

    ref = _reference(attn, x)
    assert bool(jnp.allclose(out, ref, atol=5e-2, rtol=5e-2)), (
        "Pallas output diverges from pure-JAX reference")

    print("KERNEL_OK")
</pallas_src>

<mosaic_0001>
module attributes {stable_mosaic.version = 11 : i64} {
  func.func @_linear_kernel(%arg0: i32, %arg1: i32, %arg2: i32, %arg3: memref<16x32xf32, #tpu.memory_space<vmem>>, %arg4: memref<32x96xf32, #tpu.memory_space<vmem>>, %arg5: memref<1x96xf32, #tpu.memory_space<vmem>>, %arg6: memref<16x96xbf16, #tpu.memory_space<vmem>>, %arg7: memref<16x96xf32, #tpu.memory_space<vmem>>) attributes {dimension_semantics = [#tpu.dimension_semantics<parallel>, #tpu.dimension_semantics<parallel>, #tpu.dimension_semantics<arbitrary>], iteration_bounds = array<i64: 1, 1, 1>, scalar_prefetch = 0 : i64, scratch_operands = 1 : i64, tpu.core_type = #tpu.core_type<tc>, window_params = [{transform_indices = @transform_0, window_bounds = array<i64: 16, 32>}, {transform_indices = @transform_1, window_bounds = array<i64: 32, 96>}, {transform_indices = @transform_2, window_bounds = array<i64: 1, 96>}, {transform_indices = @transform_3, window_bounds = array<i64: 16, 96>}]} {
    %c0_i32 = arith.constant 0 : i32
    %0 = arith.cmpi eq, %arg2, %c0_i32 : i32
    %1 = arith.extui %0 : i1 to i32
    %c0_i32_0 = arith.constant 0 : i32
    %2 = arith.cmpi ne, %1, %c0_i32_0 : i32
    scf.if %2 {
      %cst_10 = arith.constant 0.000000e+00 : f32
      %14 = vector.broadcast %cst_10 : f32 to vector<16x96xf32>
      %c0_11 = arith.constant 0 : index
      %c0_12 = arith.constant 0 : index
      %15 = vector.load %arg7[%c0_11, %c0_12] : memref<16x96xf32, #tpu.memory_space<vmem>>, vector<16x96xf32>
      tpu.vector_store %arg7[%c0_11, %c0_12], %14 {strides = array<i32>} : memref<16x96xf32, #tpu.memory_space<vmem>>, vector<16x96xf32>,
    } else {
    }
    %c0 = arith.constant 0 : index
    %c0_1 = arith.constant 0 : index
    %3 = vector.load %arg7[%c0, %c0_1] : memref<16x96xf32, #tpu.memory_space<vmem>>, vector<16x96xf32>
    %c0_2 = arith.constant 0 : index
    %c0_3 = arith.constant 0 : index
    %4 = vector.load %arg3[%c0_2, %c0_3] : memref<16x32xf32, #tpu.memory_space<vmem>>, vector<16x32xf32>
    %5 = arith.truncf %4 : vector<16x32xf32> to vector<16x32xbf16>
    %c0_4 = arith.constant 0 : index
    %c0_5 = arith.constant 0 : index
    %6 = vector.load %arg4[%c0_4, %c0_5] : memref<32x96xf32, #tpu.memory_space<vmem>>, vector<32x96xf32>
    %7 = arith.truncf %6 : vector<32x96xf32> to vector<32x96xbf16>
    %cst = arith.constant dense<0.000000e+00> : vector<16x96xf32>
    %8 = tpu.matmul %5, %7, %cst {dimension_numbers = #tpu.dot_dimension_numbers<[1], [0], [0], [1], [0, 0, 1, 1], [], []>} : vector<16x32xbf16>, vector<32x96xbf16>, vector<16x96xf32> -> vector<16x96xf32>
    %9 = arith.addf %3, %8 : vector<16x96xf32>
    %c0_6 = arith.constant 0 : index
    %c0_7 = arith.constant 0 : index
    %10 = vector.load %arg7[%c0_6, %c0_7] : memref<16x96xf32, #tpu.memory_space<vmem>>, vector<16x96xf32>
    tpu.vector_store %arg7[%c0_6, %c0_7], %9 {strides = array<i32>} : memref<16x96xf32, #tpu.memory_space<vmem>>, vector<16x96xf32>,
    %c0_i32_8 = arith.constant 0 : i32
    %11 = arith.cmpi eq, %arg2, %c0_i32_8 : i32
    %12 = arith.extui %11 : i1 to i32
    %c0_i32_9 = arith.constant 0 : i32
    %13 = arith.cmpi ne, %12, %c0_i32_9 : i32
    scf.if %13 {
      %c0_10 = arith.constant 0 : index
      %c0_11 = arith.constant 0 : index
      %14 = vector.load %arg7[%c0_10, %c0_11] : memref<16x96xf32, #tpu.memory_space<vmem>>, vector<16x96xf32>
      %c0_12 = arith.constant 0 : index
      %c0_13 = arith.constant 0 : index
      %15 = vector.load %arg5[%c0_12, %c0_13] : memref<1x96xf32, #tpu.memory_space<vmem>>, vector<1x96xf32>
      %16 = vector.broadcast %15 : vector<1x96xf32> to vector<16x96xf32>
      %17 = arith.addf %14, %16 : vector<16x96xf32>
      %18 = arith.truncf %17 : vector<16x96xf32> to vector<16x96xbf16>
      %c0_14 = arith.constant 0 : index
      %c0_15 = arith.constant 0 : index
      %19 = vector.load %arg6[%c0_14, %c0_15] : memref<16x96xbf16, #tpu.memory_space<vmem>>, vector<16x96xbf16>
      tpu.vector_store %arg6[%c0_14, %c0_15], %18 {strides = array<i32>} : memref<16x96xbf16, #tpu.memory_space<vmem>>, vector<16x96xbf16>,
    } else {
    }
    return
  }
  func.func @transform_0(%arg0: i32, %arg1: i32, %arg2: i32) -> (i32, i32) {
    %c0_i32 = arith.constant 0 : i32
    return %arg0, %arg2 : i32, i32
  }
  func.func @transform_1(%arg0: i32, %arg1: i32, %arg2: i32) -> (i32, i32) {
    %c0_i32 = arith.constant 0 : i32
    return %arg2, %arg1 : i32, i32
  }
  func.func @transform_2(%arg0: i32, %arg1: i32, %arg2: i32) -> (i32, i32) {
    %c0_i32 = arith.constant 0 : i32
    %c0_i32_0 = arith.constant 0 : i32
    return %c0_i32, %arg1 : i32, i32
  }
  func.func @transform_3(%arg0: i32, %arg1: i32, %arg2: i32) -> (i32, i32) {
    %c0_i32 = arith.constant 0 : i32
    return %arg0, %arg1 : i32, i32
  }
}

</mosaic_0001>

<llo_original>
// kernel: tpu_custom_call.1
$region0: #{tpu_custom_call.1}
  #allocation0 [shape = 'u32[]', space=smem, size = 0x4, offset = 0x4, fixed_abs, tag = 'smem constant byte address 0x4 - core index']
  #allocation1 [shape = 'u32[144,128]{1,0:T(1,128)}', space=vmem, size = 0x12000, scoped, tag = 'internal scratch']
  #allocation2 [shape = 'f32[16,96]{1,0:T(8,128)}', space=vmem, size = 0x2000, scoped, tag = 'scratch operand']
  %s0 = inlined_call_operand.hbm [shape: f32[16,32], index: 0, kind: input, shape index: {}]
  %s1 = inlined_call_operand.hbm [shape: f32[32,96], index: 1, kind: input, shape index: {}]
  %s2 = inlined_call_operand.vmem [shape: f32[1,96], index: 2, kind: input, shape index: {}]
  %s3 = inlined_call_operand.hbm [shape: bf16[16,96], index: 3, kind: output, shape index: {}]
  %s4 = sld [smem:[#allocation0]]
  $region38: #{tpu_custom_call.1} parent=0
    _
  %s6 = ssub.s32 1, %s4
  %s7 = scalar_select 0, %s6, %s4
  $region1: #{tpu_custom_call.1} parent=0
    #allocation3 [shape = 'u8[8192]{0}', space=vmem, size = 0x2000, scoped, tag = 'input window, operand 0, single buffered']
    #allocation4 [shape = 's32[1]{0}', space=sflag, size = 0x4, scoped, tag = 'scoped memory for tpu_custom_call.1']
    #allocation5 [shape = 's32[1]{0}', space=sflag, size = 0x4, scoped, tag = 'scoped memory for tpu_custom_call.1']
    #allocation6 [shape = 'u8[16384]{0}', space=vmem, size = 0x4000, scoped, tag = 'input window, operand 1, single buffered']
    #allocation7 [shape = 's32[1]{0}', space=sflag, size = 0x4, scoped, tag = 'scoped memory for tpu_custom_call.1']
    #allocation8 [shape = 'u8[4096]{0}', space=vmem, size = 0x1000, scoped, tag = 'output window, operand 0, single buffered']
    %8 = vsyncpa [#allocation4], 0
    %9 = vsyncpa [#allocation7], 0
    %10 = vsyncpa [#allocation5], 0
    // Predicated region
    $region2: #{tpu_custom_call.1} parent=1 // pred_check
      _
    $region3: #{tpu_custom_call.1} parent=1 // pred_check_branch
      %12 = sbr.rel (0) target = $region5
    $region4: #{tpu_custom_call.1} parent=1 // pred_region
      %s14 = ssub.s32 256, 256
      %15 = vsyncadd [#allocation4], %s14
      %s16 = sshll.u32 [#allocation3], 4
      %s17 = int_to_ptr.vmem [resolvable:$true] %s16
      %22 = dma.hbm_to_vmem [thread:$0]  %s0, 256, %s17, [#allocation4], 128, 128, 8
    $region5: #{tpu_custom_call.1} parent=1 // pred_fallthru
      _
    // Predicated region
    $region6: #{tpu_custom_call.1} parent=1 // pred_check
      _
    $region7: #{tpu_custom_call.1} parent=1 // pred_check_branch
      %24 = sbr.rel (0) target = $region9
    $region8: #{tpu_custom_call.1} parent=1 // pred_region
      %s26 = ssub.s32 512, 512
      %27 = vsyncadd [#allocation7], %s26
      %s28 = sshll.u32 [#allocation6], 4
      %s29 = int_to_ptr.vmem [resolvable:$true] %s28
      %34 = dma.hbm_to_vmem [thread:$0]  %s1, 512, %s29, [#allocation7], 128, 128, 8
    $region9: #{tpu_custom_call.1} parent=1 // pred_fallthru
      _
    // Predicated region
    $region10: #{tpu_custom_call.1} parent=1 // pred_check
      _
    $region11: #{tpu_custom_call.1} parent=1 // pred_check_branch
      %36 = sbr.rel (0) target = $region13
    $region12: #{tpu_custom_call.1} parent=1 // pred_region
      _
    $region13: #{tpu_custom_call.1} parent=1 // pred_fallthru
      _
    // Predicated region
    $region14: #{tpu_custom_call.1} parent=1 // pred_check
      _
    $region15: #{tpu_custom_call.1} parent=1 // pred_check_branch
      %38 = sbr.rel (0) target = $region17
    $region16: #{tpu_custom_call.1} parent=1 // pred_region
      %39 = dma.done [#allocation4], 256
    $region17: #{tpu_custom_call.1} parent=1 // pred_fallthru
      _
    // Predicated region
    $region18: #{tpu_custom_call.1} parent=1 // pred_check
      _
    $region19: #{tpu_custom_call.1} parent=1 // pred_check_branch
      %41 = sbr.rel (0) target = $region21
    $region20: #{tpu_custom_call.1} parent=1 // pred_region
      %42 = dma.done [#allocation7], 512
    $region21: #{tpu_custom_call.1} parent=1 // pred_fallthru
      _
    %p44 = scmp.eq.s32.totalorder 0, 0
    // Predicated region
    $region22: #{tpu_custom_call.1} parent=1 // pred_check
      %p45 = pneg %p44
    $region23: #{tpu_custom_call.1} parent=1 // pred_check_branch
      %47 = sbr.rel (%p45) target = $region25
    $region24: #{tpu_custom_call.1} parent=1 // pred_region
      %vm48 = vcmask 785408
      %49 = vst.msk [vmem:[#allocation2] sm:$0xff] %vm48, 0.0
      %50 = vst.msk [vmem:[#allocation2 + $0x8] sm:$0xff] %vm48, 0.0
    $region25: #{tpu_custom_call.1} parent=1 // pred_fallthru
      _
    %v51 = vld [vmem:[#allocation2] sm:$0xff]
    %v52 = vld [vmem:[#allocation2 + $0x8] sm:$0xff]
    %v53 = vld [vmem:[#allocation3] sm:$0xff]
    %v54 = vld [vmem:[#allocation3 + $0x8] sm:$0xff]
    %v55 = vpack.c.bf16 %v54, %v53
    %v56 = vld [vmem:[#allocation6] sm:$0xff]
    %v57 = vld [vmem:[#allocation6 + $0x8] sm:$0xff]
    %v58 = vld [vmem:[#allocation6 + $0x10] sm:$0xff]
    %v59 = vld [vmem:[#allocation6 + $0x18] sm:$0xff]
    %v60 = vpack.c.bf16 %v57, %v56
    %v61 = vpack.c.bf16 %v59, %v58
    %vm62 = vcmask 261120
    %v64 = vsel %vm62, %v55, 0
    %66 = vmatprep.subr.bf16.mxu0 0
    %67 = vmatpush1.bf16.msra.mxu0 %v60
    %68 = vmatprep.subr.bf16.mxu0 0
    %69 = vmatpush1.bf16.msra.mxu0 %v61
    %70 = vmatprep.subr.bf16.mxu0 0
    %71 = vmatpush1.bf16.msra.mxu0 0
    %72 = vmatprep.subr.bf16.mxu0 0
    %73 = vmatpush1.bf16.msra.mxu0 0
    %74 = vmatprep.subr.bf16.mxu0 0
    %75 = vmatpush1.bf16.msra.mxu0 0
    %76 = vmatprep.subr.bf16.mxu0 0
    %77 = vmatpush1.bf16.msra.mxu0 0
    %78 = vmatprep.subr.bf16.mxu0 0
    %79 = vmatpush1.bf16.msra.mxu0 0
    %80 = vmatprep.subr.bf16.mxu0 0
    %81 = vmatpush1.bf16.msra.mxu0 0
    %82 = vmatprep.subr.bf16.mxu0 0
    %83 = vmatpush1.bf16.msra.mxu0 0
    %84 = vmatprep.subr.bf16.mxu0 0
    %85 = vmatpush1.bf16.msra.mxu0 0
    %86 = vmatprep.subr.bf16.mxu0 0
    %87 = vmatpush1.bf16.msra.mxu0 0
    %88 = vmatprep.subr.bf16.mxu0 0
    %89 = vmatpush1.bf16.msra.mxu0 0
    %90 = vmatprep.subr.bf16.mxu0 0
    %91 = vmatpush1.bf16.msra.mxu0 0
    %92 = vmatprep.subr.bf16.mxu0 0
    %93 = vmatpush1.bf16.msra.mxu0 0
    %94 = vmatprep.subr.bf16.mxu0 0
    %95 = vmatpush1.bf16.msra.mxu0 0
    %96 = vmatprep.subr.bf16.mxu0 0
    %97 = vmatpush1.bf16.msra.mxu0 0
    %98 = vmatprep.mubr.bf16.mxu0 0
    %99 = vmatmul.mubr.bf16.gmra.mrb[0].mxu0 %v64
    %v100 = vpop.f32.mrb[0].mxu0
    %v101 = vadd.f32 0.0, %v100
    %v102 = vpop.f32.mrb[0].mxu0
    %v103 = vpop.f32.mrb[0].mxu0
    %v104 = vadd.f32 0.0, %v103
    %v105 = vpop.f32.mrb[0].mxu0
    %106 = vdwg.mxu0
    %v107 = vadd.f32 %v51, %v101
    %v108 = vadd.f32 %v52, %v104
    %vm109 = vcmask 785408
    %110 = vst.msk [vmem:[#allocation2] sm:$0xff] %vm109, %v107
    %111 = vst.msk [vmem:[#allocation2 + $0x8] sm:$0xff] %vm109, %v108
    // Predicated region
    $region26: #{tpu_custom_call.1} parent=1 // pred_check
      %p112 = pneg %p44
    $region27: #{tpu_custom_call.1} parent=1 // pred_check_branch
      %114 = sbr.rel (%p112) target = $region29
    $region28: #{tpu_custom_call.1} parent=1 // pred_region
      %v115 = vld [vmem:[#allocation2] sm:$0xff]
      %v116 = vld [vmem:[#allocation2 + $0x8] sm:$0xff]
      %v117 = vld [vmem:[%s2] sm:$0x1]
      %v119 = vlaneseq
      %v120 = vshrl.u32 %v119, 7
      %v121 = vsub.s32 0, %v120
      %v122 = vrot.slane %v117, %v121
      %v124 = vadd.f32 %v115, %v122
      %v125 = vadd.f32 %v116, %v122
      %v126 = vpack.c.bf16 %v125, %v124
      %v128 = vunpack.c.l.b16 %v126
      %v129 = vunpack.c.h.b16 %v126
      %v130 = vpack.c.b16 %v128, %v128
      %v131 = vpack.c.b16 %v129, %v129
      %vm134 = vcmask 781312
      %135 = vst.msk [vmem:[#allocation8] sm:$0xf] %vm134, %v130
      %136 = vst.msk [vmem:[#allocation8 + $0x4] sm:$0xf] %vm134, %v131
    $region29: #{tpu_custom_call.1} parent=1 // pred_fallthru
      _
    // Predicated region
    $region30: #{tpu_custom_call.1} parent=1 // pred_check
      _
    $region31: #{tpu_custom_call.1} parent=1 // pred_check_branch
      %138 = sbr.rel (0) target = $region33
    $region32: #{tpu_custom_call.1} parent=1 // pred_region
      %s140 = ssub.s32 128, 128
      %141 = vsyncadd [#allocation5], %s140
      %s142 = sshll.u32 [#allocation8], 4
      %s143 = int_to_ptr.vmem [resolvable:$true] %s142
      %148 = dma.vmem_to_hbm [thread:$0]  %s143, 128, %s3, [#allocation5], 64, 64, 4
    $region33: #{tpu_custom_call.1} parent=1 // pred_fallthru
      _
    // Predicated region
    $region34: #{tpu_custom_call.1} parent=1 // pred_check
      _
    $region35: #{tpu_custom_call.1} parent=1 // pred_check_branch
      %150 = sbr.rel (0) target = $region37
    $region36: #{tpu_custom_call.1} parent=1 // pred_region
      %151 = dma.done [#allocation5], 128
    $region37: #{tpu_custom_call.1} parent=1 // pred_fallthru
      _
    %152 = vsyncpa [#allocation4], 1
    %153 = vsyncpa [#allocation7], 1
    %154 = vsyncpa [#allocation5], 1

</llo_original>
